<compile_context>
chip_gen: v6e
topology: v6e:2x2x1
jax: 0.10.0
libtpu: 0.0.40
codegen_flags: <defaults>
</compile_context>

<pallas_src>
import functools

import jax
import jax.numpy as jnp
from jax.experimental import pallas as pl
from jax.experimental.pallas import tpu as pltpu

LANE = 128
SUBLANE = 8
CHUNK_ROWS = 512            # inner-loop chunk: 512x128 f32 = 256 KiB per temp


def _tpu_config():
    """Per-generation tiling config: (num_tensorcores, default block rows, vmem limit)."""
    kind = ""
    try:
        kind = jax.devices()[0].device_kind.lower()
    except Exception:  # pragma: no cover - defensive; assume single-TC part
        pass
    if "v7" in kind or "7x" in kind:
        # v7x: 2 TensorCores, 64 MiB VMEM -> moderate blocks, 2-way core split.
        return 2, 8192, 40 * 1024 * 1024
    # v5e / v6e: 1 TensorCore, 128 MiB VMEM -> big blocks, no core split.
    return 1, 16384, 64 * 1024 * 1024


def _mse_partial_kernel(x_ref, t_ref, acc_ref, *,
                        block_rows, chunk_rows, rows_total, steps_per_core):
    c = pl.program_id(0)   # core slot ("parallel"; size 1 on single-TC parts)
    i = pl.program_id(1)   # reduction step ("arbitrary")

    @pl.when(i == 0)
    def _init():
        acc_ref[...] = jnp.zeros_like(acc_ref)

    # Intended (unclamped) block index; the index_map clamps the actual DMA,
    # so duplicate/partial blocks are neutralized here via the masked path.
    blk = c * steps_per_core + i
    row_start = blk * block_rows
    n_chunks = block_rows // chunk_rows

    def block_sum(masked):
        # Stream the block in chunk_rows-row chunks so diff/square temporaries
        # never materialize the full (block_rows, 128) slab in VMEM.
        def chunk_body(j, acc):
            off = pl.multiple_of(j * chunk_rows, chunk_rows)
            xv = x_ref[pl.ds(off, chunk_rows), :].astype(jnp.float32)
            tv = t_ref[pl.ds(off, chunk_rows), :].astype(jnp.float32)
            d = xv - tv
            sq = d * d
            if masked:
                # select (not multiply) so NaN/Inf in Pallas pad never leaks.
                rid = off + jax.lax.broadcasted_iota(
                    jnp.int32, (chunk_rows, LANE), 0)
                sq = jnp.where(rid < (rows_total - row_start), sq, 0.0)
            # Tile-aligned fold (chunk_rows,128) -> (8,128): pure vreg adds.
            return acc + sq.reshape(
                chunk_rows // SUBLANE, SUBLANE, LANE).sum(axis=0)

        init = jnp.zeros((SUBLANE, LANE), jnp.float32)
        if n_chunks == 1:
            return chunk_body(0, init)
        return jax.lax.fori_loop(0, n_chunks, chunk_body, init)

    is_full = (row_start + block_rows) <= rows_total

    @pl.when(is_full)
    def _full_block():
        acc_ref[0, :, :] += block_sum(masked=False)

    @pl.when(jnp.logical_not(is_full))
    def _tail_block():
        acc_ref[0, :, :] += block_sum(masked=True)


def _plain_mse(x, target):
    d = x.astype(jnp.float32) - target.astype(jnp.float32)
    return jnp.mean(d * d)


def content_score(x, target):
    """Returns (x, score) where score == mean((x - target)**2) as f32 scalar."""
    assert x.shape == target.shape, "x and target must have identical shapes"
    n = x.size
    rows = n // LANE

    # Ragged sizes (numel % 128 != 0): a pre-kernel slice/pad would materialize
    # a compacted copy of BOTH inputs (~2x HBM traffic), dwarfing any in-kernel
    # gain; a single fused XLA reduction is one read pass and near roofline.
    # Tiny inputs (< 8 lane-rows) are likewise not worth a kernel launch.
    if (rows * LANE != n) or (rows < SUBLANE):
        return x, _plain_mse(x, target)

    num_cores_hw, default_rows, vmem_limit = _tpu_config()

    # Dtype-aware VMEM cap: 2 inputs x 2 buffers x block_bytes <= 75% of limit.
    itemsize = max(jnp.dtype(x.dtype).itemsize, jnp.dtype(target.dtype).itemsize)
    rows_cap = max(SUBLANE, ((vmem_limit * 3) // 16) // (LANE * itemsize))

    if rows >= CHUNK_ROWS:
        block_rows = min(default_rows, rows, rows_cap)
        block_rows = max(CHUNK_ROWS, (block_rows // CHUNK_ROWS) * CHUNK_ROWS)
        chunk_rows = CHUNK_ROWS
    else:
        block_rows = (rows // SUBLANE) * SUBLANE
        chunk_rows = block_rows

    num_blocks = -(-rows // block_rows)                       # cdiv
    num_cores = min(num_cores_hw, num_blocks)                 # no core split for 1 block
    steps_per_core = -(-num_blocks // num_cores)              # cdiv

    x2d = x.reshape(rows, LANE)          # n % 128 == 0: pure reshape, no copy
    t2d = target.reshape(rows, LANE)     # original dtype; cast happens in-kernel

    kernel = functools.partial(
        _mse_partial_kernel,
        block_rows=block_rows,
        chunk_rows=chunk_rows,
        rows_total=rows,
        steps_per_core=steps_per_core,
    )

    def in_map(c, i):
        # Clamp so over-allocated steps (odd num_blocks with a 2-core split)
        # re-read the last valid block; the kernel masks them to zero.
        return (jnp.minimum(c * steps_per_core + i, num_blocks - 1), 0)

    partials = pl.pallas_call(
        kernel,
        out_shape=jax.ShapeDtypeStruct((num_cores, SUBLANE, LANE), jnp.float32),
        grid_spec=pltpu.PrefetchScalarGridSpec(
            num_scalar_prefetch=0,
            grid=(num_cores, steps_per_core),
            in_specs=[
                pl.BlockSpec((block_rows, LANE), in_map),
                pl.BlockSpec((block_rows, LANE), in_map),
            ],
            out_specs=pl.BlockSpec((1, SUBLANE, LANE), lambda c, i: (c, 0, 0)),
        ),
        compiler_params=pltpu.CompilerParams(
            dimension_semantics=("parallel", "arbitrary"),
            vmem_limit_bytes=vmem_limit,
        ),
    )(x2d, t2d)

    # Single cross-lane reduce + 1/N scale, once, on the tiny partial-sum slab.
    score = jnp.sum(partials) * jnp.float32(1.0 / float(n))

    # Module returns x unchanged; the score is returned as a side value
    # (PyTorch stashes it on self.score).
    return x, score


if __name__ == "__main__":
    key = jax.random.PRNGKey(0)
    kx, kt, kx2, kt2, kx3, kt3 = jax.random.split(key, 6)

    # 1) Small NCHW shape consistent with the module's usage (single-block path).
    x = jax.random.normal(kx, (2, 4, 16, 16), dtype=jnp.float32)
    target = jax.random.normal(kt, (2, 4, 16, 16), dtype=jnp.float32)
    out, score = jax.jit(content_score)(x, target)
    out = jax.block_until_ready(out)
    score = jax.block_until_ready(score)
    ref = jnp.mean((x - target) ** 2)
    assert jnp.allclose(score, ref, rtol=1e-5, atol=1e-5), (score, ref)
    assert jnp.array_equal(out, x), "forward must return x unchanged"

    # 2) Medium shape exercising multi-block grid, chunked inner loop, and the
    #    gated tail-block mask (rows = 1056, block_rows = 1024).
    x2 = jax.random.normal(kx2, (4, 8, 128, 33), dtype=jnp.float32)
    t2 = jax.random.normal(kt2, (4, 8, 128, 33), dtype=jnp.float32)
    out2, score2 = jax.jit(content_score)(x2, t2)
    score2 = jax.block_until_ready(score2)
    ref2 = jnp.mean((x2 - t2) ** 2)
    assert jnp.allclose(score2, ref2, rtol=1e-5, atol=1e-5), (score2, ref2)
    assert jnp.array_equal(out2, x2)

    # 3) Ragged shape (numel % 128 != 0): plain-JAX fused-reduction fallback.
    x3 = jax.random.normal(kx3, (2, 3, 17, 16), dtype=jnp.float32)
    t3 = jax.random.normal(kt3, (2, 3, 17, 16), dtype=jnp.float32)
    out3, score3 = jax.jit(content_score)(x3, t3)
    score3 = jax.block_until_ready(score3)
    ref3 = jnp.mean((x3 - t3) ** 2)
    assert jnp.allclose(score3, ref3, rtol=1e-5, atol=1e-5), (score3, ref3)
    assert jnp.array_equal(out3, x3)

    print("KERNEL_OK")
</pallas_src>

<mosaic_0001>
module attributes {stable_mosaic.version = 11 : i64} {
  func.func @_mse_partial_kernel(%arg0: i32, %arg1: i32, %arg2: memref<16x128xf32, #tpu.memory_space<vmem>>, %arg3: memref<16x128xf32, #tpu.memory_space<vmem>>, %arg4: memref<1x8x128xf32, #tpu.memory_space<vmem>>) attributes {dimension_semantics = [#tpu.dimension_semantics<parallel>, #tpu.dimension_semantics<arbitrary>], iteration_bounds = array<i64: 1, 1>, scalar_prefetch = 0 : i64, scratch_operands = 0 : i64, tpu.core_type = #tpu.core_type<tc>, window_params = [{transform_indices = @transform_0, window_bounds = array<i64: 16, 128>}, {transform_indices = @transform_1, window_bounds = array<i64: 16, 128>}, {transform_indices = @transform_2, window_bounds = array<i64: 1, 8, 128>}]} {
    %c0_i32 = arith.constant 0 : i32
    %0 = arith.cmpi eq, %arg1, %c0_i32 : i32
    %1 = arith.extui %0 : i1 to i32
    %c0_i32_0 = arith.constant 0 : i32
    %2 = arith.cmpi ne, %1, %c0_i32_0 : i32
    scf.if %2 {
      %cst = arith.constant 0.000000e+00 : f32
      %13 = vector.broadcast %cst : f32 to vector<1x8x128xf32>
      %c0 = arith.constant 0 : index
      %c0_5 = arith.constant 0 : index
      %c0_6 = arith.constant 0 : index
      %14 = vector.load %arg4[%c0, %c0_5, %c0_6] : memref<1x8x128xf32, #tpu.memory_space<vmem>>, vector<1x8x128xf32>
      tpu.vector_store %arg4[%c0, %c0_5, %c0_6], %13 {strides = array<i32>} : memref<1x8x128xf32, #tpu.memory_space<vmem>>, vector<1x8x128xf32>,
    } else {
    }
    %c1_i32 = arith.constant 1 : i32
    %3 = arith.muli %arg0, %c1_i32 : i32
    %4 = arith.addi %3, %arg1 : i32
    %c16_i32 = arith.constant 16 : i32
    %5 = arith.muli %4, %c16_i32 : i32
    %c16_i32_1 = arith.constant 16 : i32
    %6 = arith.addi %5, %c16_i32_1 : i32
    %c16_i32_2 = arith.constant 16 : i32
    %7 = arith.cmpi sle, %6, %c16_i32_2 : i32
    %8 = arith.extui %7 : i1 to i32
    %c0_i32_3 = arith.constant 0 : i32
    %9 = arith.cmpi ne, %8, %c0_i32_3 : i32
    scf.if %9 {
      %c0 = arith.constant 0 : index
      %c0_5 = arith.constant 0 : index
      %c0_6 = arith.constant 0 : index
      %13 = vector.load %arg4[%c0, %c0_5, %c0_6] : memref<1x8x128xf32, #tpu.memory_space<vmem>>, vector<1x8x128xf32>
      %14 = vector.shape_cast %13 : vector<1x8x128xf32> to vector<8x128xf32>
      %cst = arith.constant 0.000000e+00 : f32
      %15 = vector.broadcast %cst : f32 to vector<8x128xf32>
      %c0_i32_7 = arith.constant 0 : i32
      %16 = tpu.assume_multiple %c0_i32_7, 16 : i32
      %17 = arith.index_cast %16 : i32 to index
      %c0_8 = arith.constant 0 : index
      %18 = vector.load %arg2[%17, %c0_8] : memref<16x128xf32, #tpu.memory_space<vmem>>, vector<16x128xf32>
      %19 = arith.index_cast %16 : i32 to index
      %c0_9 = arith.constant 0 : index
      %20 = vector.load %arg3[%19, %c0_9] : memref<16x128xf32, #tpu.memory_space<vmem>>, vector<16x128xf32>
      %21 = arith.subf %18, %20 : vector<16x128xf32>
      %22 = arith.mulf %21, %21 : vector<16x128xf32>
      %23 = vector.shape_cast %22 : vector<16x128xf32> to vector<2x8x128xf32>
      %cst_10 = arith.constant dense<0.000000e+00> : vector<8x128xf32>
      %24 = vector.multi_reduction <add>, %23, %cst_10 [0] : vector<2x8x128xf32> to vector<8x128xf32>
      %25 = arith.addf %15, %24 : vector<8x128xf32>
      %26 = arith.addf %14, %25 : vector<8x128xf32>
      %c0_11 = arith.constant 0 : index
      %c0_12 = arith.constant 0 : index
      %c0_13 = arith.constant 0 : index
      %27 = vector.load %arg4[%c0_11, %c0_12, %c0_13] : memref<1x8x128xf32, #tpu.memory_space<vmem>>, vector<1x8x128xf32>
      %28 = vector.shape_cast %27 : vector<1x8x128xf32> to vector<8x128xf32>
      %29 = vector.shape_cast %26 : vector<8x128xf32> to vector<1x8x128xf32>
      tpu.vector_store %arg4[%c0_11, %c0_12, %c0_13], %29 {strides = array<i32>} : memref<1x8x128xf32, #tpu.memory_space<vmem>>, vector<1x8x128xf32>,
    } else {
    }
    %true = arith.constant true
    %10 = arith.xori %7, %true : i1
    %11 = arith.extui %10 : i1 to i32
    %c0_i32_4 = arith.constant 0 : i32
    %12 = arith.cmpi ne, %11, %c0_i32_4 : i32
    scf.if %12 {
      %c0 = arith.constant 0 : index
      %c0_5 = arith.constant 0 : index
      %c0_6 = arith.constant 0 : index
      %13 = vector.load %arg4[%c0, %c0_5, %c0_6] : memref<1x8x128xf32, #tpu.memory_space<vmem>>, vector<1x8x128xf32>
      %14 = vector.shape_cast %13 : vector<1x8x128xf32> to vector<8x128xf32>
      %cst = arith.constant 0.000000e+00 : f32
      %15 = vector.broadcast %cst : f32 to vector<8x128xf32>
      %c0_i32_7 = arith.constant 0 : i32
      %16 = tpu.assume_multiple %c0_i32_7, 16 : i32
      %17 = arith.index_cast %16 : i32 to index
      %c0_8 = arith.constant 0 : index
      %18 = vector.load %arg2[%17, %c0_8] : memref<16x128xf32, #tpu.memory_space<vmem>>, vector<16x128xf32>
      %19 = arith.index_cast %16 : i32 to index
      %c0_9 = arith.constant 0 : index
      %20 = vector.load %arg3[%19, %c0_9] : memref<16x128xf32, #tpu.memory_space<vmem>>, vector<16x128xf32>
      %21 = arith.subf %18, %20 : vector<16x128xf32>
      %22 = arith.mulf %21, %21 : vector<16x128xf32>
      %23 = tpu.iota {dimensions = array<i32: 0>} : vector<16x128xi32>
      %24 = vector.broadcast %16 : i32 to vector<16x128xi32>
      %25 = arith.addi %24, %23 : vector<16x128xi32>
      %c16_i32_10 = arith.constant 16 : i32
      %26 = arith.subi %c16_i32_10, %5 : i32
      %27 = vector.broadcast %26 : i32 to vector<16x128xi32>
      %28 = arith.cmpi slt, %25, %27 : vector<16x128xi32>
      %cst_11 = arith.constant 0.000000e+00 : f32
      %29 = vector.broadcast %cst_11 : f32 to vector<16x128xf32>
      %30 = arith.select %28, %22, %29 : vector<16x128xi1>, vector<16x128xf32>
      %31 = vector.shape_cast %30 : vector<16x128xf32> to vector<2x8x128xf32>
      %cst_12 = arith.constant dense<0.000000e+00> : vector<8x128xf32>
      %32 = vector.multi_reduction <add>, %31, %cst_12 [0] : vector<2x8x128xf32> to vector<8x128xf32>
      %33 = arith.addf %15, %32 : vector<8x128xf32>
      %34 = arith.addf %14, %33 : vector<8x128xf32>
      %c0_13 = arith.constant 0 : index
      %c0_14 = arith.constant 0 : index
      %c0_15 = arith.constant 0 : index
      %35 = vector.load %arg4[%c0_13, %c0_14, %c0_15] : memref<1x8x128xf32, #tpu.memory_space<vmem>>, vector<1x8x128xf32>
      %36 = vector.shape_cast %35 : vector<1x8x128xf32> to vector<8x128xf32>
      %37 = vector.shape_cast %34 : vector<8x128xf32> to vector<1x8x128xf32>
      tpu.vector_store %arg4[%c0_13, %c0_14, %c0_15], %37 {strides = array<i32>} : memref<1x8x128xf32, #tpu.memory_space<vmem>>, vector<1x8x128xf32>,
    } else {
    }
    return
  }
  func.func @transform_0(%arg0: i32, %arg1: i32) -> (i32, i32) {
    %c1_i32 = arith.constant 1 : i32
    %0 = arith.muli %arg0, %c1_i32 : i32
    %1 = arith.addi %0, %arg1 : i32
    %c0_i32 = arith.constant 0 : i32
    %2 = arith.minsi %1, %c0_i32 : i32
    %c0_i32_0 = arith.constant 0 : i32
    %c0_i32_1 = arith.constant 0 : i32
    return %2, %c0_i32_0 : i32, i32
  }
  func.func @transform_1(%arg0: i32, %arg1: i32) -> (i32, i32) {
    %c1_i32 = arith.constant 1 : i32
    %0 = arith.muli %arg0, %c1_i32 : i32
    %1 = arith.addi %0, %arg1 : i32
    %c0_i32 = arith.constant 0 : i32
    %2 = arith.minsi %1, %c0_i32 : i32
    %c0_i32_0 = arith.constant 0 : i32
    %c0_i32_1 = arith.constant 0 : i32
    return %2, %c0_i32_0 : i32, i32
  }
  func.func @transform_2(%arg0: i32, %arg1: i32) -> (i32, i32, i32) {
    %c0_i32 = arith.constant 0 : i32
    %c0_i32_0 = arith.constant 0 : i32
    %c0_i32_1 = arith.constant 0 : i32
    return %arg0, %c0_i32, %c0_i32_0 : i32, i32, i32
  }
}

</mosaic_0001>

<llo_original>
// kernel: content_score.1
$region0: #{content_score.1}
  #allocation0 [shape = 'u32[]', space=smem, size = 0x4, offset = 0x4, fixed_abs, tag = 'smem constant byte address 0x4 - core index']
  #allocation1 [shape = 'u32[144,128]{1,0:T(1,128)}', space=vmem, size = 0x12000, scoped, tag = 'internal scratch']
  %s0 = inlined_call_operand.vmem [shape: f32[16,128], index: 0, kind: input, shape index: {}]
  %s1 = inlined_call_operand.vmem [shape: f32[16,128], index: 1, kind: input, shape index: {}]
  %s2 = inlined_call_operand.vmem [shape: f32[1,8,128], index: 2, kind: output, shape index: {}]
  %s3 = sld [smem:[#allocation0]]
  $region30: #{content_score.1} parent=0
    _
  %s5 = ssub.s32 1, %s3
  %s6 = scalar_select 0, %s5, %s3
  // Predicated region
  $region2: #{content_score.1} parent=0 // pred_check
    _
  $region3: #{content_score.1} parent=0 // pred_check_branch
    %8 = sbr.rel (0) target = $region5
  $region4: #{content_score.1} parent=0 // pred_region
    %s9 = sadd.s32 0, 0
    %p10 = scmp.lt.s32.totalorder %s9, 0
    %s11 = scalar_select %p10, %s9, 0
    %s12 = smul.u32 2, %s11
    %p13 = scmp.lt.s32.totalorder %s12, 1
    %s14 = scalar_select %p13, %s12, 1
    %s15 = smul.addr %s14, 8
    %s16 = scalar_lea.vmem %s0, %s15
    %s17 = sadd.s32 0, 0
    %p18 = scmp.lt.s32.totalorder %s17, 0
    %s19 = scalar_select %p18, %s17, 0
    %s20 = smul.u32 2, %s19
  $region5: #{content_score.1} parent=0 // pred_fallthru
    _
  // Predicated region
  $region6: #{content_score.1} parent=0 // pred_check
    _
  $region7: #{content_score.1} parent=0 // pred_check_branch
    %22 = sbr.rel (0) target = $region9
  $region8: #{content_score.1} parent=0 // pred_region
    %s23 = sadd.s32 0, 0
    %p24 = scmp.lt.s32.totalorder %s23, 0
    %s25 = scalar_select %p24, %s23, 0
    %s26 = smul.u32 2, %s25
    %p27 = scmp.lt.s32.totalorder %s26, 1
    %s28 = scalar_select %p27, %s26, 1
    %s29 = smul.addr %s28, 8
    %s30 = scalar_lea.vmem %s1, %s29
    %s31 = sadd.s32 0, 0
    %p32 = scmp.lt.s32.totalorder %s31, 0
    %s33 = scalar_select %p32, %s31, 0
    %s34 = smul.u32 2, %s33
  $region9: #{content_score.1} parent=0 // pred_fallthru
    _
  %s35 = sadd.s32 0, 0
  %p36 = scmp.lt.s32.totalorder %s35, 0
  %s37 = scalar_select %p36, %s35, 0
  %s38 = smul.u32 2, %s37
  %p39 = scmp.lt.s32.totalorder %s38, 1
  %s40 = scalar_select %p39, %s38, 1
  %s41 = smul.addr %s40, 8
  %s42 = scalar_lea.vmem %s0, %s41
  %s43 = sadd.s32 0, 0
  %p44 = scmp.lt.s32.totalorder %s43, 0
  %s45 = scalar_select %p44, %s43, 0
  %s46 = smul.u32 2, %s45
  %p47 = scmp.lt.s32.totalorder %s46, 1
  %s48 = scalar_select %p47, %s46, 1
  %s49 = smul.addr %s48, 8
  %s50 = scalar_lea.vmem %s1, %s49
  %s51 = sadd.s32 0, 0
  %p52 = scmp.lt.s32.totalorder %s51, 0
  %s53 = scalar_select %p52, %s51, 0
  %s54 = smul.u32 2, %s53
  %p55 = scmp.lt.s32.totalorder %s54, 1
  %s56 = scalar_select %p55, %s54, 1
  %s57 = smul.addr %s56, 8
  %s58 = scalar_lea.vmem %s0, %s57
  %s59 = sadd.s32 0, 0
  %p60 = scmp.lt.s32.totalorder %s59, 0
  %s61 = scalar_select %p60, %s59, 0
  %s62 = smul.u32 2, %s61
  %s63 = sadd.s32 0, 0
  %p64 = scmp.lt.s32.totalorder %s63, 0
  %s65 = scalar_select %p64, %s63, 0
  %s66 = smul.u32 2, %s65
  %p67 = scmp.lt.s32.totalorder %s66, 1
  %s68 = scalar_select %p67, %s66, 1
  %s69 = smul.addr %s68, 8
  %s70 = scalar_lea.vmem %s1, %s69
  %s71 = sadd.s32 0, 0
  %p72 = scmp.lt.s32.totalorder %s71, 0
  %s73 = scalar_select %p72, %s71, 0
  %s74 = smul.u32 2, %s73
  %p75 = scmp.eq.s32.totalorder 0, 0
  // Predicated region
  $region10: #{content_score.1} parent=0 // pred_check
    %p76 = pneg %p75
  $region11: #{content_score.1} parent=0 // pred_check_branch
    %78 = sbr.rel (%p76) target = $region13
  $region12: #{content_score.1} parent=0 // pred_region
    %79 = vst [vmem:[%s2] sm:$0xff] 0.0
  $region13: #{content_score.1} parent=0 // pred_fallthru
    _
  %s80 = sadd.s32 0, 0
  %s81 = smul.u32 %s80, 16
  %s82 = sadd.s32 %s81, 16
  %p83 = scmp.le.s32.totalorder %s82, 16
  // Predicated region
  $region14: #{content_score.1} parent=0 // pred_check
    %p84 = pneg %p83
  $region15: #{content_score.1} parent=0 // pred_check_branch
    %86 = sbr.rel (%p84) target = $region17
  $region16: #{content_score.1} parent=0 // pred_region
    %v87 = vld [vmem:[%s2] sm:$0xff]
    %v88 = vld [vmem:[%s58] sm:$0xff]
    %v89 = vld [vmem:[%s58 + $0x8] sm:$0xff]
    %v90 = vld [vmem:[%s70] sm:$0xff]
    %v91 = vld [vmem:[%s70 + $0x8] sm:$0xff]
    %v92 = vsub.f32 %v88, %v90
    %v93 = vsub.f32 %v89, %v91
    %v94 = vmul.f32 %v92, %v92
    %v95 = vmul.f32 %v93, %v93
    %v96 = vadd.f32 %v94, %v95
    %v97 = vadd.f32 %v96, 0.0
    %v98 = vadd.f32 %v87, %v97
    %99 = vst [vmem:[%s2] sm:$0xff] %v98
  $region17: #{content_score.1} parent=0 // pred_fallthru
    _
  %p100 = scmp.gt.s32.totalorder %s82, 16
  // Predicated region
  $region18: #{content_score.1} parent=0 // pred_check
    %p101 = pneg %p100
  $region19: #{content_score.1} parent=0 // pred_check_branch
    %103 = sbr.rel (%p101) target = $region21
  $region20: #{content_score.1} parent=0 // pred_region
    %v104 = vld [vmem:[%s2] sm:$0xff]
    %v105 = vld [vmem:[%s58] sm:$0xff]
    %v106 = vld [vmem:[%s58 + $0x8] sm:$0xff]
    %v107 = vld [vmem:[%s70] sm:$0xff]
    %v108 = vld [vmem:[%s70 + $0x8] sm:$0xff]
    %v109 = vsub.f32 %v105, %v107
    %v110 = vsub.f32 %v106, %v108
    %v111 = vmul.f32 %v109, %v109
    %v112 = vmul.f32 %v110, %v110
    %v113 = vlaneseq
    %v114 = vshrl.u32 %v113, 7
    %v115 = vadd.s32 %v114, 8
    %v116 = vstv 0
    %v117 = vadd.s32 %v116, %v114
    %v118 = vadd.s32 %v116, %v115
    %s119 = ssub.s32 16, %s81
    %v120 = vstv %s119
    %vm121 = vcmp.lt.s32.totalorder %v117, %v120
    %vm122 = vcmp.lt.s32.totalorder %v118, %v120
    %v123 = vsel %vm121, %v111, 0.0
    %v124 = vsel %vm122, %v112, 0.0
    %v125 = vadd.f32 %v123, %v124
    %v126 = vadd.f32 %v125, 0.0
    %v127 = vadd.f32 %v104, %v126
    %128 = vst [vmem:[%s2] sm:$0xff] %v127
  $region21: #{content_score.1} parent=0 // pred_fallthru
    _
  // Predicated region
  $region22: #{content_score.1} parent=0 // pred_check
    _
  $region23: #{content_score.1} parent=0 // pred_check_branch
    %130 = sbr.rel (0) target = $region25
  $region24: #{content_score.1} parent=0 // pred_region
    _
  $region25: #{content_score.1} parent=0 // pred_fallthru
    _
  // Predicated region
  $region26: #{content_score.1} parent=0 // pred_check
    _
  $region27: #{content_score.1} parent=0 // pred_check_branch
    %132 = sbr.rel (0) target = $region29
  $region28: #{content_score.1} parent=0 // pred_region
    _
  $region29: #{content_score.1} parent=0 // pred_fallthru
    _

</llo_original>
